<compile_context>
chip_gen: v5e
topology: v5e:2x2
jax: 0.10.0
libtpu: 0.0.40
codegen_flags: <defaults>
</compile_context>

<pallas_src>
import jax
import jax.numpy as jnp
from jax.experimental import pallas as pl
from jax.experimental.pallas import tpu as pltpu


ARCH = [12, 64, 64, 1]   # default NLF arch


def _round_up(x, m):
    return ((x + m - 1) // m) * m


def nlf_kernel(xT_ref, w1_ref, b1_ref, w2_ref, b2_ref, w3_ref, b3_ref, o_ref):
    """One batch tile of the NLF forward pass, feature-major layout.

    xT_ref : (12, tile_m)   input tile, batch in lanes
    w1_ref : (64, 12)       b1_ref : (64, 1)
    w2_ref : (64, 64)       b2_ref : (64, 1)
    w3_ref : (64, 1)        b3_ref : (1, 1)
    o_ref  : (1, tile_m)    lane-dense output tile
    """
    xT = xT_ref[...]                                              # (12, tile_m)
    h = jnp.tanh(
        jnp.dot(w1_ref[...], xT, preferred_element_type=jnp.float32) + b1_ref[...]
    )                                                             # (64, tile_m)
    h = jnp.tanh(
        jnp.dot(w2_ref[...], h, preferred_element_type=jnp.float32) + b2_ref[...]
    )                                                             # (64, tile_m)
    # Final (64 -> 1) layer as VPU multiply + XLU sublane reduction; avoids a
    # width-1 MXU matmul that would use 1/128 of the output array.
    z = jnp.sum(h * w3_ref[...], axis=0, keepdims=True) + b3_ref[...]  # (1, tile_m)
    o_ref[...] = jnp.abs(jnp.tanh(z)).astype(o_ref.dtype)


def nlf_forward(x, params, *, tile_m=512):
    """Forward pass of NLF.

    x:      (N, 12) float32
    params: list of (W, b) with PyTorch nn.Linear shapes: W (out, in), b (out,)
    returns (N, 1) float32, equal to |tanh(L3(tanh(L2(tanh(L1(x))))))|
    """
    (w1, b1), (w2, b2), (w3, b3) = params
    N, d_in = x.shape
    d_h1 = w1.shape[0]
    d_h2 = w2.shape[0]
    assert d_in == w1.shape[1]
    assert w3.shape[0] == 1

    # Batch tile: multiple of 128 (lane-dense), capped for small batches.
    tile_m = max(128, _round_up(min(tile_m, max(N, 1)), 128))
    n_pad = _round_up(N, tile_m)

    # Feature-major layout: batch in the lane dimension; zero-pad extra rows.
    xT = jnp.zeros((d_in, n_pad), x.dtype).at[:, :N].set(x.T)

    # Reshape params into kernel layout (column biases, column w3).
    b1c = b1.reshape(d_h1, 1)
    b2c = b2.reshape(d_h2, 1)
    w3c = w3.reshape(1, d_h2).T          # (64, 1)
    b3c = b3.reshape(1, 1)

    grid = (n_pad // tile_m,)

    flops = 2 * n_pad * (d_in * d_h1 + d_h1 * d_h2 + d_h2)
    transcendentals = n_pad * (d_h1 + d_h2 + 1)
    bytes_accessed = 4 * (
        n_pad * (d_in + 1)
        + w1.size + b1.size + w2.size + b2.size + w3.size + b3.size
    )

    def full_spec(shape):
        return pl.BlockSpec(shape, lambda i: (0, 0))

    out = pl.pallas_call(
        nlf_kernel,
        out_shape=jax.ShapeDtypeStruct((1, n_pad), jnp.float32),
        grid_spec=pltpu.PrefetchScalarGridSpec(
            num_scalar_prefetch=0,
            grid=grid,
            in_specs=[
                pl.BlockSpec((d_in, tile_m), lambda i: (0, i)),  # x tile (batch in lanes)
                full_spec(w1.shape), full_spec(b1c.shape),
                full_spec(w2.shape), full_spec(b2c.shape),
                full_spec(w3c.shape), full_spec(b3c.shape),
            ],
            out_specs=pl.BlockSpec((1, tile_m), lambda i: (0, i)),
        ),
        compiler_params=pltpu.CompilerParams(
            dimension_semantics=("parallel",),
        ),
        cost_estimate=pl.CostEstimate(
            flops=flops,
            transcendentals=transcendentals,
            bytes_accessed=bytes_accessed,
        ),
    )(xT, w1, b1c, w2, b2c, w3c, b3c)

    return out[0, :N].reshape(N, 1)


def init_params(key, arch=ARCH):
    """nn.Linear-style params: W (out, in), b (out,), U(-1/sqrt(in), 1/sqrt(in))."""
    params = []
    for i in range(len(arch) - 1):
        fan_in, fan_out = arch[i], arch[i + 1]
        key, kw, kb = jax.random.split(key, 3)
        bound = 1.0 / jnp.sqrt(fan_in)
        w = jax.random.uniform(kw, (fan_out, fan_in), jnp.float32, -bound, bound)
        b = jax.random.uniform(kb, (fan_out,), jnp.float32, -bound, bound)
        params.append((w, b))
    return params


def nlf_reference(x, params):
    """Pure-JAX mirror of the PyTorch forward for validation."""
    h = x
    for w, b in params:
        h = jnp.tanh(h @ w.T + b)
    return jnp.abs(h)


if __name__ == "__main__":
    key = jax.random.PRNGKey(0)
    key, kx = jax.random.split(key)

    # Small, non-multiple-of-tile batch to exercise padding and a >1-step grid.
    batch = 300
    x = jax.random.normal(kx, (batch, ARCH[0]), jnp.float32)

    params = init_params(jax.random.PRNGKey(0))

    out = nlf_forward(x, params, tile_m=128)   # small tile here; default is 512
    out = jax.block_until_ready(out)

    ref = nlf_reference(x, params)
    assert out.shape == (batch, 1)
    assert jnp.allclose(out, ref, atol=1e-5, rtol=1e-5), "mismatch vs reference"

    print("KERNEL_OK")
</pallas_src>

<mosaic_0001>
module attributes {stable_mosaic.version = 11 : i64} {
  func.func @nlf_kernel(%arg0: i32, %arg1: memref<12x128xf32, #tpu.memory_space<vmem>>, %arg2: memref<64x12xf32, #tpu.memory_space<vmem>>, %arg3: memref<64x1xf32, #tpu.memory_space<vmem>>, %arg4: memref<64x64xf32, #tpu.memory_space<vmem>>, %arg5: memref<64x1xf32, #tpu.memory_space<vmem>>, %arg6: memref<64x1xf32, #tpu.memory_space<vmem>>, %arg7: memref<1x1xf32, #tpu.memory_space<vmem>>, %arg8: memref<1x128xf32, #tpu.memory_space<vmem>>) attributes {dimension_semantics = [#tpu.dimension_semantics<parallel>], iteration_bounds = array<i64: 3>, scalar_prefetch = 0 : i64, scratch_operands = 0 : i64, tpu.core_type = #tpu.core_type<tc>, window_params = [{transform_indices = @transform_0, window_bounds = array<i64: 12, 128>}, {pipeline_mode = #tpu.pipeline_mode<synchronous>, transform_indices = @transform_1, window_bounds = array<i64: 64, 12>}, {pipeline_mode = #tpu.pipeline_mode<synchronous>, transform_indices = @transform_2, window_bounds = array<i64: 64, 1>}, {pipeline_mode = #tpu.pipeline_mode<synchronous>, transform_indices = @transform_3, window_bounds = array<i64: 64, 64>}, {pipeline_mode = #tpu.pipeline_mode<synchronous>, transform_indices = @transform_4, window_bounds = array<i64: 64, 1>}, {pipeline_mode = #tpu.pipeline_mode<synchronous>, transform_indices = @transform_5, window_bounds = array<i64: 64, 1>}, {pipeline_mode = #tpu.pipeline_mode<synchronous>, transform_indices = @transform_6, window_bounds = array<i64: 1, 1>}, {transform_indices = @transform_7, window_bounds = array<i64: 1, 128>}]} {
    %c0 = arith.constant 0 : index
    %c0_0 = arith.constant 0 : index
    %0 = vector.load %arg1[%c0, %c0_0] : memref<12x128xf32, #tpu.memory_space<vmem>>, vector<12x128xf32>
    %c0_1 = arith.constant 0 : index
    %c0_2 = arith.constant 0 : index
    %1 = vector.load %arg2[%c0_1, %c0_2] : memref<64x12xf32, #tpu.memory_space<vmem>>, vector<64x12xf32>
    %cst = arith.constant dense<0.000000e+00> : vector<64x128xf32>
    %2 = tpu.matmul %1, %0, %cst {dimension_numbers = #tpu.dot_dimension_numbers<[1], [0], [0], [1], [0, 0, 1, 1], [], []>} : vector<64x12xf32>, vector<12x128xf32>, vector<64x128xf32> -> vector<64x128xf32>
    %c0_3 = arith.constant 0 : index
    %c0_4 = arith.constant 0 : index
    %3 = vector.load %arg3[%c0_3, %c0_4] : memref<64x1xf32, #tpu.memory_space<vmem>>, vector<64x1xf32>
    %4 = vector.broadcast %3 : vector<64x1xf32> to vector<64x128xf32>
    %5 = arith.addf %2, %4 : vector<64x128xf32>
    %6 = math.tanh %5 : vector<64x128xf32>
    %c0_5 = arith.constant 0 : index
    %c0_6 = arith.constant 0 : index
    %7 = vector.load %arg4[%c0_5, %c0_6] : memref<64x64xf32, #tpu.memory_space<vmem>>, vector<64x64xf32>
    %cst_7 = arith.constant dense<0.000000e+00> : vector<64x128xf32>
    %8 = tpu.matmul %7, %6, %cst_7 {dimension_numbers = #tpu.dot_dimension_numbers<[1], [0], [0], [1], [0, 0, 1, 1], [], []>} : vector<64x64xf32>, vector<64x128xf32>, vector<64x128xf32> -> vector<64x128xf32>
    %c0_8 = arith.constant 0 : index
    %c0_9 = arith.constant 0 : index
    %9 = vector.load %arg5[%c0_8, %c0_9] : memref<64x1xf32, #tpu.memory_space<vmem>>, vector<64x1xf32>
    %10 = vector.broadcast %9 : vector<64x1xf32> to vector<64x128xf32>
    %11 = arith.addf %8, %10 : vector<64x128xf32>
    %12 = math.tanh %11 : vector<64x128xf32>
    %c0_10 = arith.constant 0 : index
    %c0_11 = arith.constant 0 : index
    %13 = vector.load %arg6[%c0_10, %c0_11] : memref<64x1xf32, #tpu.memory_space<vmem>>, vector<64x1xf32>
    %14 = vector.broadcast %13 : vector<64x1xf32> to vector<64x128xf32>
    %15 = arith.mulf %12, %14 : vector<64x128xf32>
    %cst_12 = arith.constant dense<0.000000e+00> : vector<128xf32>
    %16 = vector.multi_reduction <add>, %15, %cst_12 [0] : vector<64x128xf32> to vector<128xf32>
    %17 = vector.shape_cast %16 : vector<128xf32> to vector<1x128xf32>
    %c0_13 = arith.constant 0 : index
    %c0_14 = arith.constant 0 : index
    %18 = vector.load %arg7[%c0_13, %c0_14] : memref<1x1xf32, #tpu.memory_space<vmem>>, vector<1x1xf32>
    %19 = vector.broadcast %18 : vector<1x1xf32> to vector<1x128xf32>
    %20 = arith.addf %17, %19 : vector<1x128xf32>
    %21 = math.tanh %20 : vector<1x128xf32>
    %22 = math.absf %21 : vector<1x128xf32>
    %c0_15 = arith.constant 0 : index
    %c0_16 = arith.constant 0 : index
    %23 = vector.load %arg8[%c0_15, %c0_16] : memref<1x128xf32, #tpu.memory_space<vmem>>, vector<1x128xf32>
    tpu.vector_store %arg8[%c0_15, %c0_16], %22 {strides = array<i32>} : memref<1x128xf32, #tpu.memory_space<vmem>>, vector<1x128xf32>,
    return
  }
  func.func @transform_0(%arg0: i32) -> (i32, i32) {
    %c0_i32 = arith.constant 0 : i32
    %c0_i32_0 = arith.constant 0 : i32
    return %c0_i32, %arg0 : i32, i32
  }
  func.func @transform_1(%arg0: i32) -> (i32, i32) {
    %c0_i32 = arith.constant 0 : i32
    %c0_i32_0 = arith.constant 0 : i32
    %c0_i32_1 = arith.constant 0 : i32
    return %c0_i32, %c0_i32_0 : i32, i32
  }
  func.func @transform_2(%arg0: i32) -> (i32, i32) {
    %c0_i32 = arith.constant 0 : i32
    %c0_i32_0 = arith.constant 0 : i32
    %c0_i32_1 = arith.constant 0 : i32
    return %c0_i32, %c0_i32_0 : i32, i32
  }
  func.func @transform_3(%arg0: i32) -> (i32, i32) {
    %c0_i32 = arith.constant 0 : i32
    %c0_i32_0 = arith.constant 0 : i32
    %c0_i32_1 = arith.constant 0 : i32
    return %c0_i32, %c0_i32_0 : i32, i32
  }
  func.func @transform_4(%arg0: i32) -> (i32, i32) {
    %c0_i32 = arith.constant 0 : i32
    %c0_i32_0 = arith.constant 0 : i32
    %c0_i32_1 = arith.constant 0 : i32
    return %c0_i32, %c0_i32_0 : i32, i32
  }
  func.func @transform_5(%arg0: i32) -> (i32, i32) {
    %c0_i32 = arith.constant 0 : i32
    %c0_i32_0 = arith.constant 0 : i32
    %c0_i32_1 = arith.constant 0 : i32
    return %c0_i32, %c0_i32_0 : i32, i32
  }
  func.func @transform_6(%arg0: i32) -> (i32, i32) {
    %c0_i32 = arith.constant 0 : i32
    %c0_i32_0 = arith.constant 0 : i32
    %c0_i32_1 = arith.constant 0 : i32
    return %c0_i32, %c0_i32_0 : i32, i32
  }
  func.func @transform_7(%arg0: i32) -> (i32, i32) {
    %c0_i32 = arith.constant 0 : i32
    %c0_i32_0 = arith.constant 0 : i32
    return %c0_i32, %arg0 : i32, i32
  }
}

</mosaic_0001>

<llo_original>
// kernel: tpu_custom_call.1
$region0: #{tpu_custom_call.1}
  #allocation0 [shape = 'u32[]', space=smem, size = 0x4, offset = 0x4, fixed_abs, tag = 'smem constant byte address 0x4 - core index']
  #allocation1 [shape = 'u32[72,128]{1,0:T(1,128)}', space=vmem, size = 0x9000, scoped, tag = 'internal scratch']
  #allocation2 [shape = 'f32[1,1]{1,0:T(1,128)S(1)}', space=vmem, size = 0x200, scoped, tag = 'scoped memory for tpu_custom_call.1']
  %s0 = inlined_call_operand.vmem [shape: f32[12,384], index: 0, kind: input, shape index: {}]
  %s1 = inlined_call_operand.vmem [shape: f32[64,12], index: 1, kind: input, shape index: {}]
  %s2 = inlined_call_operand.vmem [shape: f32[64,1], index: 2, kind: input, shape index: {}]
  %s3 = inlined_call_operand.vmem [shape: f32[64,64], index: 3, kind: input, shape index: {}]
  %s4 = inlined_call_operand.vmem [shape: f32[64,1], index: 4, kind: input, shape index: {}]
  %s5 = inlined_call_operand.vmem [shape: f32[64,1], index: 5, kind: input, shape index: {}]
  %s6 = inlined_call_operand.<no memory space> [shape: f32[1,1], index: 6, kind: input, shape index: {}]
  %s7 = inlined_call_operand.hbm [shape: f32[1,384], index: 7, kind: output, shape index: {}]
  %s8 = sld [smem:[#allocation0]]
  $region99: #{tpu_custom_call.1} parent=0
    _
  %s10 = ssub.s32 1, %s8
  %s11 = scalar_select 0, %s10, %s8
  %v12 = vstv %s6
  %13 = vst [vmem:[#allocation2] sm:$0x1] %v12
  $region1: #{tpu_custom_call.1} parent=0
    #allocation3 [shape = 'u8[16384]{0}', space=vmem, size = 0x4000, scoped, tag = 'input window, operand 0']
    #allocation4 [shape = 'u8[1024]{0}', space=vmem, size = 0x400, scoped, tag = 'output window, operand 0']
    #allocation5 [shape = 's32[2]{0}', space=sflag, size = 0x8, scoped, tag = 'scoped memory for tpu_custom_call.1']
    %14 = vsyncpa [#allocation5], 0
    %s15 = scalar_lea.sflag [#allocation5], 1
    %16 = vsyncpa %s15, 0
    loop: start=0, step=1, limit=5
    $region2: #{tpu_custom_call.1} parent=1 // loop_pre_header
      _
    $region3: #{tpu_custom_call.1} parent=1 // loop_header
      %s18 = sphi 0, %s22
      %p19 = scmp.ge.s32.totalorder %s18, 5
      %s28 = sphi 0, %s30
      %s31 = sphi 0, %s28
      %s32 = sphi 0, %s31
      %s48 = sphi 0, %s32
      %s52 = sphi 0, %s52
      %s54 = sphi 0, %s52
      %s55 = sphi 0, %s54
      %s69 = sphi 0, %s55
      %s73 = sphi 0, %s73
      %s75 = sphi 0, %s73
      %s76 = sphi 0, %s75
      %s90 = sphi 0, %s76
      %s94 = sphi 0, %s94
      %s96 = sphi 0, %s94
      %s97 = sphi 0, %s96
      %s111 = sphi 0, %s97
      %s115 = sphi 0, %s115
      %s117 = sphi 0, %s115
      %s118 = sphi 0, %s117
      %s132 = sphi 0, %s118
      %s136 = sphi 0, %s136
      %s138 = sphi 0, %s136
      %s139 = sphi 0, %s138
      %s153 = sphi 0, %s139
      %s157 = sphi 0, %s157
      %s159 = sphi 0, %s157
      %s160 = sphi 0, %s159
      %s174 = sphi 0, %s160
      %s180 = sphi 0, %s182
      %s183 = sphi 0, %s180
      %s184 = sphi 0, %s183
      %s200 = sphi 0, %s184
    $region4: #{tpu_custom_call.1} parent=1 // loop_header_branch
      %21 = sbr.rel (%p19) target = $region8
    $region5: #{tpu_custom_call.1} parent=1 // loop_body
      %s23 = ssub.s32 %s18, 1
      %s24 = ssub.s32 %s18, 2
      %s25 = sadd.s32 %s18, 1
      %s26 = ssub.s32 %s18, %s25
      %p27 = scmp.eq.s32.totalorder %s26, 0
      %s29 = sadd.s32 %s28, 1
      %s30 = scalar_select %p27, %s28, %s29
      %p33 = pneg %p27
      %p34 = scmp.eq.s32.totalorder %s18, 2
      %p35 = por %p33, %p34
      %p36 = scmp.ne.s32.totalorder %s28, %s31
      %p37 = scmp.eq.s32.totalorder %s18, 0
      %p38 = por %p36, %p37
      %p39 = scmp.ne.s32.totalorder %s28, %s31
      %p40 = scmp.eq.s32.totalorder %s23, 2
      %p41 = por %p39, %p40
      %p42 = scmp.ne.s32.totalorder %s31, %s32
      %p43 = scmp.eq.s32.totalorder %s23, 0
      %p44 = por %p42, %p43
      %p45 = scmp.ne.s32.totalorder %s31, %s32
      %p46 = scmp.eq.s32.totalorder %s24, 2
      %p47 = por %p45, %p46
      %p49 = scmp.ne.s32.totalorder %s32, %s48
      %p50 = scmp.eq.s32.totalorder %s24, 0
      %p51 = por %p49, %p50
      %s53 = sadd.s32 %s52, 1
      %p56 = scmp.eq.s32.totalorder %s18, 2
      %p57 = scmp.ne.s32.totalorder %s52, %s54
      %p58 = scmp.eq.s32.totalorder %s18, 0
      %p59 = por %p57, %p58
      %p60 = scmp.ne.s32.totalorder %s52, %s54
      %p61 = scmp.eq.s32.totalorder %s23, 2
      %p62 = por %p60, %p61
      %p63 = scmp.ne.s32.totalorder %s54, %s55
      %p64 = scmp.eq.s32.totalorder %s23, 0
      %p65 = por %p63, %p64
      %p66 = scmp.ne.s32.totalorder %s54, %s55
      %p67 = scmp.eq.s32.totalorder %s24, 2
      %p68 = por %p66, %p67
      %p70 = scmp.ne.s32.totalorder %s55, %s69
      %p71 = scmp.eq.s32.totalorder %s24, 0
      %p72 = por %p70, %p71
      %s74 = sadd.s32 %s73, 1
      %p77 = scmp.eq.s32.totalorder %s18, 2
      %p78 = scmp.ne.s32.totalorder %s73, %s75
      %p79 = scmp.eq.s32.totalorder %s18, 0
      %p80 = por %p78, %p79
      %p81 = scmp.ne.s32.totalorder %s73, %s75
      %p82 = scmp.eq.s32.totalorder %s23, 2
      %p83 = por %p81, %p82
      %p84 = scmp.ne.s32.totalorder %s75, %s76
      %p85 = scmp.eq.s32.totalorder %s23, 0
      %p86 = por %p84, %p85
      %p87 = scmp.ne.s32.totalorder %s75, %s76
      %p88 = scmp.eq.s32.totalorder %s24, 2
      %p89 = por %p87, %p88
      %p91 = scmp.ne.s32.totalorder %s76, %s90
      %p92 = scmp.eq.s32.totalorder %s24, 0
      %p93 = por %p91, %p92
      %s95 = sadd.s32 %s94, 1
      %p98 = scmp.eq.s32.totalorder %s18, 2
      %p99 = scmp.ne.s32.totalorder %s94, %s96
      %p100 = scmp.eq.s32.totalorder %s18, 0
      %p101 = por %p99, %p100
      %p102 = scmp.ne.s32.totalorder %s94, %s96
      %p103 = scmp.eq.s32.totalorder %s23, 2
      %p104 = por %p102, %p103
      %p105 = scmp.ne.s32.totalorder %s96, %s97
      %p106 = scmp.eq.s32.totalorder %s23, 0
      %p107 = por %p105, %p106
      %p108 = scmp.ne.s32.totalorder %s96, %s97
      %p109 = scmp.eq.s32.totalorder %s24, 2
      %p110 = por %p108, %p109
      %p112 = scmp.ne.s32.totalorder %s97, %s111
      %p113 = scmp.eq.s32.totalorder %s24, 0
      %p114 = por %p112, %p113
      %s116 = sadd.s32 %s115, 1
      %p119 = scmp.eq.s32.totalorder %s18, 2
      %p120 = scmp.ne.s32.totalorder %s115, %s117
      %p121 = scmp.eq.s32.totalorder %s18, 0
      %p122 = por %p120, %p121
      %p123 = scmp.ne.s32.totalorder %s115, %s117
      %p124 = scmp.eq.s32.totalorder %s23, 2
      %p125 = por %p123, %p124
      %p126 = scmp.ne.s32.totalorder %s117, %s118
      %p127 = scmp.eq.s32.totalorder %s23, 0
      %p128 = por %p126, %p127
      %p129 = scmp.ne.s32.totalorder %s117, %s118
      %p130 = scmp.eq.s32.totalorder %s24, 2
      %p131 = por %p129, %p130
      %p133 = scmp.ne.s32.totalorder %s118, %s132
      %p134 = scmp.eq.s32.totalorder %s24, 0
      %p135 = por %p133, %p134
      %s137 = sadd.s32 %s136, 1
      %p140 = scmp.eq.s32.totalorder %s18, 2
      %p141 = scmp.ne.s32.totalorder %s136, %s138
      %p142 = scmp.eq.s32.totalorder %s18, 0
      %p143 = por %p141, %p142
      %p144 = scmp.ne.s32.totalorder %s136, %s138
      %p145 = scmp.eq.s32.totalorder %s23, 2
      %p146 = por %p144, %p145
      %p147 = scmp.ne.s32.totalorder %s138, %s139
      %p148 = scmp.eq.s32.totalorder %s23, 0
      %p149 = por %p147, %p148
      %p150 = scmp.ne.s32.totalorder %s138, %s139
      %p151 = scmp.eq.s32.totalorder %s24, 2
      %p152 = por %p150, %p151
      %p154 = scmp.ne.s32.totalorder %s139, %s153
      %p155 = scmp.eq.s32.totalorder %s24, 0
      %p156 = por %p154, %p155
      %s158 = sadd.s32 %s157, 1
      %p161 = scmp.eq.s32.totalorder %s18, 2
      %p162 = scmp.ne.s32.totalorder %s157, %s159
      %p163 = scmp.eq.s32.totalorder %s18, 0
      %p164 = por %p162, %p163
      %p165 = scmp.ne.s32.totalorder %s157, %s159
      %p166 = scmp.eq.s32.totalorder %s23, 2
      %p167 = por %p165, %p166
      %p168 = scmp.ne.s32.totalorder %s159, %s160
      %p169 = scmp.eq.s32.totalorder %s23, 0
      %p170 = por %p168, %p169
      %p171 = scmp.ne.s32.totalorder %s159, %s160
      %p172 = scmp.eq.s32.totalorder %s24, 2
      %p173 = por %p171, %p172
      %p175 = scmp.ne.s32.totalorder %s160, %s174
      %p176 = scmp.eq.s32.totalorder %s24, 0
      %p177 = por %p175, %p176
      %s178 = ssub.s32 %s18, %s25
      %p179 = scmp.eq.s32.totalorder %s178, 0
      %s181 = sadd.s32 %s180, 1
      %s182 = scalar_select %p179, %s180, %s181
      %p185 = pneg %p179
      %p186 = scmp.eq.s32.totalorder %s18, 2
      %p187 = por %p185, %p186
      %p188 = scmp.ne.s32.totalorder %s180, %s183
      %p189 = scmp.eq.s32.totalorder %s18, 0
      %p190 = por %p188, %p189
      %p191 = scmp.ne.s32.totalorder %s180, %s183
      %p192 = scmp.eq.s32.totalorder %s23, 2
      %p193 = por %p191, %p192
      %p194 = scmp.ne.s32.totalorder %s183, %s184
      %p195 = scmp.eq.s32.totalorder %s23, 0
      %p196 = por %p194, %p195
      %p197 = scmp.ne.s32.totalorder %s183, %s184
      %p198 = scmp.eq.s32.totalorder %s24, 2
      %p199 = por %p197, %p198
      %p201 = scmp.ne.s32.totalorder %s184, %s200
      %p202 = scmp.eq.s32.totalorder %s24, 0
      %p203 = por %p201, %p202
      %p204 = scmp.le.s32.totalorder 1, %s18
      %p205 = scmp.lt.s32.totalorder %s18, 4
      %p206 = pnand %p204, %p205
      %p207 = pneg %p206
      // Predicated region
      $region9: #{tpu_custom_call.1} parent=5 // pred_check
        _
      $region10: #{tpu_custom_call.1} parent=5 // pred_check_branch
        %209 = sbr.rel (%p206) target = $region12
      $region11: #{tpu_custom_call.1} parent=5 // pred_region
        %s210 = ssub.s32 %s18, 1
        // Predicated region
        $region13: #{tpu_custom_call.1} parent=11 // pred_check
          %p211 = pneg %p65
        $region14: #{tpu_custom_call.1} parent=11 // pred_check_branch
          %213 = sbr.rel (%p211) target = $region16
        $region15: #{tpu_custom_call.1} parent=11 // pred_region
          _
        $region16: #{tpu_custom_call.1} parent=11 // pred_fallthru
          _
        // Predicated region
        $region17: #{tpu_custom_call.1} parent=11 // pred_check
          %p214 = pneg %p86
        $region18: #{tpu_custom_call.1} parent=11 // pred_check_branch
          %216 = sbr.rel (%p214) target = $region20
        $region19: #{tpu_custom_call.1} parent=11 // pred_region
          _
        $region20: #{tpu_custom_call.1} parent=11 // pred_fallthru
          _
        // Predicated region
        $region21: #{tpu_custom_call.1} parent=11 // pred_check
          %p217 = pneg %p107
        $region22: #{tpu_custom_call.1} parent=11 // pred_check_branch
          %219 = sbr.rel (%p217) target = $region24
        $region23: #{tpu_custom_call.1} parent=11 // pred_region
          _
        $region24: #{tpu_custom_call.1} parent=11 // pred_fallthru
          _
        // Predicated region
        $region25: #{tpu_custom_call.1} parent=11 // pred_check
          %p220 = pneg %p128
        $region26: #{tpu_custom_call.1} parent=11 // pred_check_branch
          %222 = sbr.rel (%p220) target = $region28
        $region27: #{tpu_custom_call.1} parent=11 // pred_region
          _
        $region28: #{tpu_custom_call.1} parent=11 // pred_fallthru
          _
        // Predicated region
        $region29: #{tpu_custom_call.1} parent=11 // pred_check
          %p223 = pneg %p149
        $region30: #{tpu_custom_call.1} parent=11 // pred_check_branch
          %225 = sbr.rel (%p223) target = $region32
        $region31: #{tpu_custom_call.1} parent=11 // pred_region
          _
        $region32: #{tpu_custom_call.1} parent=11 // pred_fallthru
          _
        // Predicated region
        $region33: #{tpu_custom_call.1} parent=11 // pred_check
          %p226 = pneg %p170
        $region34: #{tpu_custom_call.1} parent=11 // pred_check_branch
          %228 = sbr.rel (%p226) target = $region36
        $region35: #{tpu_custom_call.1} parent=11 // pred_region
          _
        $region36: #{tpu_custom_call.1} parent=11 // pred_fallthru
          _
      $region12: #{tpu_custom_call.1} parent=5 // pred_fallthru
        _
      %p229 = scmp.lt.s32.totalorder %s18, 3
      // Predicated region
      $region37: #{tpu_custom_call.1} parent=5 // pred_check
        %p230 = pneg %p229
      $region38: #{tpu_custom_call.1} parent=5 // pred_check_branch
        %232 = sbr.rel (%p230) target = $region40
      $region39: #{tpu_custom_call.1} parent=5 // pred_region
        // Predicated region
        $region41: #{tpu_custom_call.1} parent=39 // pred_check
          %p233 = pneg %p38
        $region42: #{tpu_custom_call.1} parent=39 // pred_check_branch
          %235 = sbr.rel (%p233) target = $region44
        $region43: #{tpu_custom_call.1} parent=39 // pred_region
          %s236 = sand.u32 %s28, 1
          %s237 = sand.u32 %s28, 1
          %s238 = smul.addr %s237, 16
          %s239 = scalar_lea.vmem [#allocation3], %s238
          %s240 = smul.addr %s18, 8
          %s241 = scalar_lea.vmem %s0, %s240
          // Predicated region
          $region45: #{tpu_custom_call.1} parent=43 // pred_check
            _
          $region46: #{tpu_custom_call.1} parent=43 // pred_check_branch
            %243 = sbr.rel (0) target = $region48
          $region47: #{tpu_custom_call.1} parent=43 // pred_region
            // Predicated region
            $region49: #{tpu_custom_call.1} parent=47 // pred_check
              _
            $region50: #{tpu_custom_call.1} parent=47 // pred_check_branch
              %245 = sbr.rel (0) target = $region52
            $region51: #{tpu_custom_call.1} parent=47 // pred_region
              // Predicated region
              $region64: #{tpu_custom_call.1} parent=51 // pred_check
                _
              $region65: #{tpu_custom_call.1} parent=51 // pred_check_branch
                %263 = sbr.rel (0) target = $region67
              $region66: #{tpu_custom_call.1} parent=51 // pred_region
                loop: start=0, step=1, limit=1
                $region68: #{tpu_custom_call.1} parent=66 // loop_pre_header
                  _
                $region69: #{tpu_custom_call.1} parent=66 // loop_header
                  %s265 = sphi 0, %s269
                  %p266 = scmp.ge.s32.totalorder %s265, 1
                  %s270 = sphi %s241, %s241
                  %s271 = sphi %s239, %s239
                $region70: #{tpu_custom_call.1} parent=66 // loop_header_branch
                  %268 = sbr.rel (%p266) target = $region74
                $region71: #{tpu_custom_call.1} parent=66 // loop_body
                  %v272 = vld [vmem:[%s270] sm:$0xff]
                  %273 = vst [vmem:[%s271] sm:$0xff] %v272
                  %v274 = vld [vmem:[%s270 + $0x18] sm:$0xff]
                  %275 = vst [vmem:[%s271 + $0x8] sm:$0xff] %v274
                $region72: #{tpu_custom_call.1} parent=66 // loop_footer
                  %s269 = sadd.s32 1, %s265
                $region73: #{tpu_custom_call.1} parent=66 // loop_footer_branch
                  %264 = sbr.rel target = $region69
                $region74: #{tpu_custom_call.1} parent=66 // loop_exit
                  _
              $region67: #{tpu_custom_call.1} parent=51 // pred_fallthru
                _
              // Predicated region
              $region75: #{tpu_custom_call.1} parent=51 // pred_check
                _
              $region76: #{tpu_custom_call.1} parent=51 // pred_check_branch
                %277 = sbr.rel target = $region78
              $region77: #{tpu_custom_call.1} parent=51 // pred_region
                _
              $region78: #{tpu_custom_call.1} parent=51 // pred_fallthru
                _
            $region52: #{tpu_custom_call.1} parent=47 // pred_fallthru
              _
            // Predicated region
            $region53: #{tpu_custom_call.1} parent=47 // pred_check
              _
            $region54: #{tpu_custom_call.1} parent=47 // pred_check_branch
              %247 = sbr.rel target = $region56
            $region55: #{tpu_custom_call.1} parent=47 // pred_region
              %s249 = ssub.s32 256, 1
              loop: start=0, step=1, limit=1
              $region57: #{tpu_custom_call.1} parent=55 // loop_pre_header
                _
              $region58: #{tpu_custom_call.1} parent=55 // loop_header
                %s251 = sphi 0, %s255
                %p252 = scmp.ge.s32.totalorder %s251, 1
                %s256 = sphi %s241, %s241
                %s257 = sphi %s239, %s239
              $region59: #{tpu_custom_call.1} parent=55 // loop_header_branch
                %254 = sbr.rel (%p252) target = $region63
              $region60: #{tpu_custom_call.1} parent=55 // loop_body
                %v258 = vld [vmem:[%s256] sm:%s249]
                %259 = vst [vmem:[%s257] sm:%s249] %v258
                %v260 = vld [vmem:[%s256 + $0x18] sm:%s249]
                %261 = vst [vmem:[%s257 + $0x8] sm:%s249] %v260
              $region61: #{tpu_custom_call.1} parent=55 // loop_footer
                %s255 = sadd.s32 1, %s251
              $region62: #{tpu_custom_call.1} parent=55 // loop_footer_branch
                %250 = sbr.rel target = $region58
              $region63: #{tpu_custom_call.1} parent=55 // loop_exit
                _
            $region56: #{tpu_custom_call.1} parent=47 // pred_fallthru
              _
          $region48: #{tpu_custom_call.1} parent=43 // pred_fallthru
            _
          %278 = vnop
        $region44: #{tpu_custom_call.1} parent=39 // pred_fallthru
          _
      $region40: #{tpu_custom_call.1} parent=5 // pred_fallthru
        _
      %p279 = scmp.le.s32.totalorder 1, %s18
      %p280 = scmp.lt.s32.totalorder %s18, 4
      %p281 = pnand %p279, %p280
      %p282 = pneg %p281
      // Predicated region
      $region79: #{tpu_custom_call.1} parent=5 // pred_check
        _
      $region80: #{tpu_custom_call.1} parent=5 // pred_check_branch
        %284 = sbr.rel (%p281) target = $region82
      $region81: #{tpu_custom_call.1} parent=5 // pred_region
        %s285 = ssub.s32 %s18, 1
        %s286 = sand.u32 %s31, 1
        %s287 = sand.u32 %s31, 1
        %s288 = smul.addr %s287, 16
        %s289 = scalar_lea.vmem [#allocation3], %s288
        // Predicated region
        $region83: #{tpu_custom_call.1} parent=81 // pred_check
          %p290 = pneg %p44
        $region84: #{tpu_custom_call.1} parent=81 // pred_check_branch
          %292 = sbr.rel (%p290) target = $region86
        $region85: #{tpu_custom_call.1} parent=81 // pred_region
          _
        $region86: #{tpu_custom_call.1} parent=81 // pred_fallthru
          _
        %s293 = sand.u32 %s31, 1
        %s294 = sand.u32 %s31, 1
        %s295 = smul.addr %s294, 16
        %s296 = scalar_lea.vmem [#allocation3], %s295
        %p297 = pneg %p44
        %p298 = pneg %p41
        %p299 = pneg %p65
        %p300 = pneg %p62
        %p301 = pneg %p86
        %p302 = pneg %p83
        %p303 = pneg %p107
        %p304 = pneg %p104
        %p305 = pneg %p128
        %p306 = pneg %p125
        %p307 = pneg %p149
        %p308 = pneg %p146
        %p309 = pneg %p170
        %p310 = pneg %p167
        %p311 = pneg %p196
        %p312 = pneg %p193
        %s313 = sand.u32 %s183, 1
        %s314 = scalar_lea.sflag [#allocation5], %s313
        %s315 = sand.u32 %s183, 1
        %s316 = scalar_lea.vmem [#allocation4], %s315
        %v317 = vld [vmem:[%s289] sm:$0xff]
        %v318 = vld [vmem:[%s289 + $0x8] sm:$0xf]
        %v319 = vld [vmem:[%s1] sm:$0xff]
        %v320 = vld [vmem:[%s1 + $0x8] sm:$0xff]
        %v321 = vld [vmem:[%s1 + $0x10] sm:$0xff]
        %v322 = vld [vmem:[%s1 + $0x18] sm:$0xff]
        %v323 = vld [vmem:[%s1 + $0x20] sm:$0xff]
        %v324 = vld [vmem:[%s1 + $0x28] sm:$0xff]
        %v325 = vld [vmem:[%s1 + $0x30] sm:$0xff]
        %v326 = vld [vmem:[%s1 + $0x38] sm:$0xff]
        %v327 = vld [vmem:[%s2] sm:$0xff]
        %v328 = vld [vmem:[%s2 + $0x8] sm:$0xff]
        %v329 = vld [vmem:[%s2 + $0x10] sm:$0xff]
        %v330 = vld [vmem:[%s2 + $0x18] sm:$0xff]
        %v331 = vld [vmem:[%s2 + $0x20] sm:$0xff]
        %v332 = vld [vmem:[%s2 + $0x28] sm:$0xff]
        %v333 = vld [vmem:[%s2 + $0x30] sm:$0xff]
        %v334 = vld [vmem:[%s2 + $0x38] sm:$0xff]
        %336 = vset.pattern.permute.xlu0 0
        %337 = vperm.xlu0 %336, %v327
        %v338 = vpop.permute.xlu0 %337
        %341 = vset.pattern.permute.xlu0 0
        %342 = vperm.xlu0 %341, %v328
        %v343 = vpop.permute.xlu0 %342
        %346 = vset.pattern.permute.xlu0 0
        %347 = vperm.xlu0 %346, %v329
        %v348 = vpop.permute.xlu0 %347
        %351 = vset.pattern.permute.xlu0 0
        %352 = vperm.xlu0 %351, %v330
        %v353 = vpop.permute.xlu0 %352
        %356 = vset.pattern.permute.xlu0 0
        %357 = vperm.xlu0 %356, %v331
        %v358 = vpop.permute.xlu0 %357
        %361 = vset.pattern.permute.xlu0 0
        %362 = vperm.xlu0 %361, %v332
        %v363 = vpop.permute.xlu0 %362
        %366 = vset.pattern.permute.xlu0 0
        %367 = vperm.xlu0 %366, %v333
        %v368 = vpop.permute.xlu0 %367
        %371 = vset.pattern.permute.xlu0 0
        %372 = vperm.xlu0 %371, %v334
        %v373 = vpop.permute.xlu0 %372
        %vm375 = vcmask 97280
        %v377 = vsel %vm375, %v319, 0
        %v380 = vsel %vm375, %v320, 0
        %v383 = vsel %vm375, %v321, 0
        %v386 = vsel %vm375, %v322, 0
        %v389 = vsel %vm375, %v323, 0
        %v392 = vsel %vm375, %v324, 0
        %v395 = vsel %vm375, %v325, 0
        %v398 = vsel %vm375, %v326, 0
        %vm400 = vcmask 1043456
        %v402 = vsel %vm400, %v318, 0
        %404 = vmatpush.msra.mxu0 0.0
        %405 = vmatpush.msra.mxu0 0.0
        %406 = vmatpush.msra.mxu0 0.0
        %407 = vmatpush.msra.mxu0 0.0
        %408 = vmatpush.msra.mxu0 0.0
        %409 = vmatpush.msra.mxu0 0.0
        %410 = vmatpush.msra.mxu0 0.0
        %411 = vmatpush.msra.mxu0 0.0
        %412 = vmatpush.msra.mxu0 0.0
        %413 = vmatpush.msra.mxu0 0.0
        %414 = vmatpush.msra.mxu0 0.0
        %415 = vmatpush.msra.mxu0 0.0
        %416 = vmatpush.msra.mxu0 0.0
        %417 = vmatpush.msra.mxu0 0.0
        %418 = vmatpush.msra.mxu0 %v402
        %419 = vmatpush.msra.mxu0 %v317
        %420 = vmatmul.f32.gmra.mxu0 %v377
        %v421 = vpop.f32.mrf.mxu0
        %v422 = vadd.f32 %v338, %v421
        %423 = vmatmul.f32.gmra.mxu0 %v380
        %v424 = vpop.f32.mrf.mxu0
        %v425 = vadd.f32 %v343, %v424
        %426 = vmatmul.f32.gmra.mxu0 %v383
        %v427 = vpop.f32.mrf.mxu0
        %v428 = vadd.f32 %v348, %v427
        %429 = vmatmul.f32.gmra.mxu0 %v386
        %v430 = vpop.f32.mrf.mxu0
        %v431 = vadd.f32 %v353, %v430
        %432 = vmatmul.f32.gmra.mxu0 %v389
        %v433 = vpop.f32.mrf.mxu0
        %v434 = vadd.f32 %v358, %v433
        %435 = vmatmul.f32.gmra.mxu0 %v392
        %v436 = vpop.f32.mrf.mxu0
        %v437 = vadd.f32 %v363, %v436
        %438 = vmatmul.f32.gmra.mxu0 %v395
        %v439 = vpop.f32.mrf.mxu0
        %v440 = vadd.f32 %v368, %v439
        %441 = vmatmul.f32.gmra.mxu0 %v398
        %v442 = vpop.f32.mrf.mxu0
        %v443 = vadd.f32 %v373, %v442
        %444 = vdwg.mxu0
        %v445 = vtanh.pop %v422
        %v446 = vtanh.pop %v425
        %v447 = vtanh.pop %v428
        %v448 = vtanh.pop %v431
        %v449 = vtanh.pop %v434
        %v450 = vtanh.pop %v437
        %v451 = vtanh.pop %v440
        %v452 = vtanh.pop %v443
        %v453 = vld [vmem:[%s3] sm:$0xff]
        %v454 = vld [vmem:[%s3 + $0x8] sm:$0xff]
        %v455 = vld [vmem:[%s3 + $0x10] sm:$0xff]
        %v456 = vld [vmem:[%s3 + $0x18] sm:$0xff]
        %v457 = vld [vmem:[%s3 + $0x20] sm:$0xff]
        %v458 = vld [vmem:[%s3 + $0x28] sm:$0xff]
        %v459 = vld [vmem:[%s3 + $0x30] sm:$0xff]
        %v460 = vld [vmem:[%s3 + $0x38] sm:$0xff]
        %v461 = vld [vmem:[%s4] sm:$0xff]
        %v462 = vld [vmem:[%s4 + $0x8] sm:$0xff]
        %v463 = vld [vmem:[%s4 + $0x10] sm:$0xff]
        %v464 = vld [vmem:[%s4 + $0x18] sm:$0xff]
        %v465 = vld [vmem:[%s4 + $0x20] sm:$0xff]
        %v466 = vld [vmem:[%s4 + $0x28] sm:$0xff]
        %v467 = vld [vmem:[%s4 + $0x30] sm:$0xff]
        %v468 = vld [vmem:[%s4 + $0x38] sm:$0xff]
        %470 = vset.pattern.permute.xlu0 0
        %471 = vperm.xlu0 %470, %v461
        %v472 = vpop.permute.xlu0 %471
        %475 = vset.pattern.permute.xlu0 0
        %476 = vperm.xlu0 %475, %v462
        %v477 = vpop.permute.xlu0 %476
        %480 = vset.pattern.permute.xlu0 0
        %481 = vperm.xlu0 %480, %v463
        %v482 = vpop.permute.xlu0 %481
        %485 = vset.pattern.permute.xlu0 0
        %486 = vperm.xlu0 %485, %v464
        %v487 = vpop.permute.xlu0 %486
        %490 = vset.pattern.permute.xlu0 0
        %491 = vperm.xlu0 %490, %v465
        %v492 = vpop.permute.xlu0 %491
        %495 = vset.pattern.permute.xlu0 0
        %496 = vperm.xlu0 %495, %v466
        %v497 = vpop.permute.xlu0 %496
        %500 = vset.pattern.permute.xlu0 0
        %501 = vperm.xlu0 %500, %v467
        %v502 = vpop.permute.xlu0 %501
        %505 = vset.pattern.permute.xlu0 0
        %506 = vperm.xlu0 %505, %v468
        %v507 = vpop.permute.xlu0 %506
        %vm509 = vcmask 523264
        %v511 = vsel %vm509, %v453, 0
        %v514 = vsel %vm509, %v454, 0
        %v517 = vsel %vm509, %v455, 0
        %v520 = vsel %vm509, %v456, 0
        %v523 = vsel %vm509, %v457, 0
        %v526 = vsel %vm509, %v458, 0
        %v529 = vsel %vm509, %v459, 0
        %v532 = vsel %vm509, %v460, 0
        %534 = vmatpush.msra.mxu0 0.0
        %535 = vmatpush.msra.mxu0 0.0
        %536 = vmatpush.msra.mxu0 0.0
        %537 = vmatpush.msra.mxu0 0.0
        %538 = vmatpush.msra.mxu0 0.0
        %539 = vmatpush.msra.mxu0 0.0
        %540 = vmatpush.msra.mxu0 0.0
        %541 = vmatpush.msra.mxu0 0.0
        %542 = vmatpush.msra.mxu0 %v452
        %543 = vmatpush.msra.mxu0 %v451
        %544 = vmatpush.msra.mxu0 %v450
        %545 = vmatpush.msra.mxu0 %v449
        %546 = vmatpush.msra.mxu0 %v448
        %547 = vmatpush.msra.mxu0 %v447
        %548 = vmatpush.msra.mxu0 %v446
        %549 = vmatpush.msra.mxu0 %v445
        %550 = vmatmul.f32.gmra.mxu0 %v511
        %v551 = vpop.f32.mrf.mxu0
        %v552 = vadd.f32 %v472, %v551
        %553 = vmatmul.f32.gmra.mxu0 %v514
        %v554 = vpop.f32.mrf.mxu0
        %v555 = vadd.f32 %v477, %v554
        %556 = vmatmul.f32.gmra.mxu0 %v517
        %v557 = vpop.f32.mrf.mxu0
        %v558 = vadd.f32 %v482, %v557
        %559 = vmatmul.f32.gmra.mxu0 %v520
        %v560 = vpop.f32.mrf.mxu0
        %v561 = vadd.f32 %v487, %v560
        %562 = vmatmul.f32.gmra.mxu0 %v523
        %v563 = vpop.f32.mrf.mxu0
        %v564 = vadd.f32 %v492, %v563
        %565 = vmatmul.f32.gmra.mxu0 %v526
        %v566 = vpop.f32.mrf.mxu0
        %v567 = vadd.f32 %v497, %v566
        %568 = vmatmul.f32.gmra.mxu0 %v529
        %v569 = vpop.f32.mrf.mxu0
        %v570 = vadd.f32 %v502, %v569
        %571 = vmatmul.f32.gmra.mxu0 %v532
        %v572 = vpop.f32.mrf.mxu0
        %v573 = vadd.f32 %v507, %v572
        %574 = vdwg.mxu0
        %v575 = vtanh.pop %v552
        %v576 = vtanh.pop %v555
        %v577 = vtanh.pop %v558
        %v578 = vtanh.pop %v561
        %v579 = vtanh.pop %v564
        %v580 = vtanh.pop %v567
        %v581 = vtanh.pop %v570
        %v582 = vtanh.pop %v573
        %v583 = vld [vmem:[%s5] sm:$0xff]
        %v584 = vld [vmem:[%s5 + $0x8] sm:$0xff]
        %v585 = vld [vmem:[%s5 + $0x10] sm:$0xff]
        %v586 = vld [vmem:[%s5 + $0x18] sm:$0xff]
        %v587 = vld [vmem:[%s5 + $0x20] sm:$0xff]
        %v588 = vld [vmem:[%s5 + $0x28] sm:$0xff]
        %v589 = vld [vmem:[%s5 + $0x30] sm:$0xff]
        %v590 = vld [vmem:[%s5 + $0x38] sm:$0xff]
        %592 = vset.pattern.permute.xlu0 0
        %593 = vperm.xlu0 %592, %v583
        %v594 = vpop.permute.xlu0 %593
        %597 = vset.pattern.permute.xlu0 0
        %598 = vperm.xlu0 %597, %v584
        %v599 = vpop.permute.xlu0 %598
        %602 = vset.pattern.permute.xlu0 0
        %603 = vperm.xlu0 %602, %v585
        %v604 = vpop.permute.xlu0 %603
        %607 = vset.pattern.permute.xlu0 0
        %608 = vperm.xlu0 %607, %v586
        %v609 = vpop.permute.xlu0 %608
        %612 = vset.pattern.permute.xlu0 0
        %613 = vperm.xlu0 %612, %v587
        %v614 = vpop.permute.xlu0 %613
        %617 = vset.pattern.permute.xlu0 0
        %618 = vperm.xlu0 %617, %v588
        %v619 = vpop.permute.xlu0 %618
        %622 = vset.pattern.permute.xlu0 0
        %623 = vperm.xlu0 %622, %v589
        %v624 = vpop.permute.xlu0 %623
        %627 = vset.pattern.permute.xlu0 0
        %628 = vperm.xlu0 %627, %v590
        %v629 = vpop.permute.xlu0 %628
        %v631 = vmul.f32 %v575, %v594
        %v632 = vmul.f32 %v576, %v599
        %v633 = vmul.f32 %v577, %v604
        %v634 = vmul.f32 %v578, %v609
        %v635 = vmul.f32 %v579, %v614
        %v636 = vmul.f32 %v580, %v619
        %v637 = vmul.f32 %v581, %v624
        %v638 = vmul.f32 %v582, %v629
        %v639 = vadd.f32 %v631, %v632
        %v640 = vadd.f32 %v639, %v633
        %v641 = vadd.f32 %v640, %v634
        %v642 = vadd.f32 %v641, %v635
        %v643 = vadd.f32 %v642, %v636
        %v644 = vadd.f32 %v643, %v637
        %v645 = vadd.f32 %v644, %v638
        %v646 = vrot.slane %v645, 4
        %v647 = vadd.f32 %v645, %v646
        %v648 = vrot.slane %v647, 2
        %v649 = vadd.f32 %v647, %v648
        %v650 = vrot.slane %v649, 1
        %v651 = vadd.f32 %v649, %v650
        %v652 = vld [vmem:[#allocation2] sm:$0x1]
        %654 = vset.pattern.permute.xlu0 0
        %655 = vperm.xlu0 %654, %v652
        %v656 = vpop.permute.xlu0 %655
        %v658 = vperm.slane %v656, 0
        %v659 = vadd.f32 %v651, %v658
        %v660 = vtanh.pop %v659
        %v661 = vand.u32 2147483647, %v660
        %662 = vst [vmem:[%s316] sm:$0x1] %v661
        %s663 = sand.u32 %s183, 1
        %s664 = scalar_lea.sflag [#allocation5], %s663
        %s665 = sand.u32 %s183, 1
        %s666 = scalar_lea.vmem [#allocation4], %s665
        // Predicated region
        $region87: #{tpu_custom_call.1} parent=81 // pred_check
          %p667 = pneg %p193
        $region88: #{tpu_custom_call.1} parent=81 // pred_check_branch
          %669 = sbr.rel (%p667) target = $region90
        $region89: #{tpu_custom_call.1} parent=81 // pred_region
          %671 = vsyncadd %s664, 0
          %s672 = scalar_lea.hbm %s7, %s23
          %s674 = sshll.u32 %s666, 4
          %s675 = int_to_ptr.vmem [resolvable:$true] %s674
          %s676 = sshll.u32 %s672, 4
          %s677 = int_to_ptr.hbm [resolvable:$true] %s676
          %679 = dma.vmem_to_hbm [thread:$0]  %s675, 16, %s677, %s664
        $region90: #{tpu_custom_call.1} parent=81 // pred_fallthru
          _
      $region82: #{tpu_custom_call.1} parent=5 // pred_fallthru
        _
      %p680 = scmp.le.s32.totalorder 2, %s18
      // Predicated region
      $region91: #{tpu_custom_call.1} parent=5 // pred_check
        %p681 = pneg %p680
      $region92: #{tpu_custom_call.1} parent=5 // pred_check_branch
        %683 = sbr.rel (%p681) target = $region94
      $region93: #{tpu_custom_call.1} parent=5 // pred_region
        %s684 = ssub.s32 %s18, 2
        // Predicated region
        $region95: #{tpu_custom_call.1} parent=93 // pred_check
          %p685 = pneg %p199
        $region96: #{tpu_custom_call.1} parent=93 // pred_check_branch
          %687 = sbr.rel (%p685) target = $region98
        $region97: #{tpu_custom_call.1} parent=93 // pred_region
          %s688 = sand.u32 %s184, 1
          %s689 = scalar_lea.sflag [#allocation5], %s688
          %s690 = sand.u32 %s184, 1
          %s691 = scalar_lea.vmem [#allocation4], %s690
          %693 = dma.done %s689, 16
        $region98: #{tpu_custom_call.1} parent=93 // pred_fallthru
          _
      $region94: #{tpu_custom_call.1} parent=5 // pred_fallthru
        _
    $region6: #{tpu_custom_call.1} parent=1 // loop_footer
      %s22 = sadd.s32 1, %s18
    $region7: #{tpu_custom_call.1} parent=1 // loop_footer_branch
      %17 = sbr.rel target = $region3
    $region8: #{tpu_custom_call.1} parent=1 // loop_exit
      _
    %694 = vsyncpa [#allocation5], 1
    %s695 = scalar_lea.sflag [#allocation5], 1
    %696 = vsyncpa %s695, 1

</llo_original>
